<compile_context>
chip_gen: v6e
topology: v6e:2x2x1
jax: 0.10.0
libtpu: 0.0.40
codegen_flags: <defaults>
</compile_context>

<pallas_src>
import functools

import jax
import jax.numpy as jnp
from jax.experimental import pallas as pl
from jax.experimental.pallas import tpu as pltpu

IN_FEATURES = 28 * 28   # 784
HIDDEN = 128
OUT_FEATURES = 10
LANE = 128              # lane-dense padded output width


def _cdiv(a, b):
    return (a + b - 1) // b


def _round_up(n, m):
    return ((n + m - 1) // m) * m


def mlp_kernel(x_ref, w1_ref, b1_ref, w2_ref, b2_ref, o_ref):
    # In-kernel bf16 cast of the streamed f32 x (x is read from HBM only once).
    x = x_ref[...].astype(jnp.bfloat16)
    # fc1 on the MXU (bf16 operands, f32 accumulation); bias + ReLU in f32.
    h = jnp.dot(x, w1_ref[...], preferred_element_type=jnp.float32)
    h = jnp.maximum(h + b1_ref[...], 0.0)
    # fc2: lane-dense 128x128 MXU tile (columns 10..127 are zero-padded).
    y = jnp.dot(h.astype(jnp.bfloat16), w2_ref[...],
                preferred_element_type=jnp.float32)
    o_ref[...] = (y + b2_ref[...]).astype(o_ref.dtype)   # bf16 writeback


@functools.partial(jax.jit, static_argnames=("block_b",))
def net_forward(x, w1, b1, w2, b2, *, block_b=1024):
    """Pallas forward of Net: relu(x @ w1 + b1) @ w2 + b2 (weights stored as
    [in_features, out_features], i.e. transposed vs. PyTorch)."""
    B = x.shape[0]
    x2d = x.reshape(B, IN_FEATURES).astype(jnp.float32)   # = torch .view(-1, 784)

    # Batch tile: multiple of 16 (bf16 output sublane packing), capped at
    # block_b, and at ~B/2 so the grid has >=2 steps for v7x megacore.
    tb = max(16, min(block_b, _round_up(_cdiv(B, 2), 16)))
    grid = (_cdiv(B, tb),)   # partial last block handled by Pallas

    # bf16 resident weights for the MXU; biases stay f32 (elementwise in f32).
    w1b = w1.astype(jnp.bfloat16)
    w2b = w2.astype(jnp.bfloat16)
    b1f = b1.astype(jnp.float32).reshape(1, HIDDEN)
    b2f = b2.astype(jnp.float32).reshape(1, OUT_FEATURES)
    # Lane-dense output: zero-pad fc2 to 128 output columns (unmasked vst).
    w2p = jnp.pad(w2b, ((0, 0), (0, LANE - OUT_FEATURES)))
    b2p = jnp.pad(b2f, ((0, 0), (0, LANE - OUT_FEATURES)))

    cost = pl.CostEstimate(
        flops=2 * B * (IN_FEATURES * HIDDEN + HIDDEN * LANE),
        transcendentals=0,
        bytes_accessed=(B * (IN_FEATURES * 4 + LANE * 2)          # x f32 in, bf16 out
                        + IN_FEATURES * HIDDEN * 2 + HIDDEN * LANE * 2  # weights
                        + (HIDDEN + LANE) * 4))                    # biases

    resident = dict(pipeline_mode=pl.Buffered(1))   # constant index_map -> 1 buffer

    # VMEM per step (tb=1024): 2 x tb*784*4B (f32 x) + 2 x tb*128*2B (bf16 out)
    # + ~0.23 MiB resident weights  ~= 7 MiB -> fits the 16 MiB scoped default
    # on v5e/v6e and v7x's 64 MiB physical VMEM.
    out = pl.pallas_call(
        mlp_kernel,
        out_shape=jax.ShapeDtypeStruct((B, LANE), jnp.bfloat16),
        grid=grid,
        in_specs=[
            pl.BlockSpec((tb, IN_FEATURES), lambda i: (i, 0)),                 # streamed x (f32)
            pl.BlockSpec((IN_FEATURES, HIDDEN), lambda i: (0, 0), **resident),  # resident W1
            pl.BlockSpec((1, HIDDEN), lambda i: (0, 0), **resident),            # resident b1
            pl.BlockSpec((HIDDEN, LANE), lambda i: (0, 0), **resident),         # resident W2
            pl.BlockSpec((1, LANE), lambda i: (0, 0), **resident),              # resident b2
        ],
        out_specs=pl.BlockSpec((tb, LANE), lambda i: (i, 0)),
        compiler_params=pltpu.CompilerParams(
            dimension_semantics=("parallel",)),   # megacore sharding on v7x
        cost_estimate=cost,
    )(x2d, w1b, b1f, w2p, b2p)

    # Cheap slice + upcast (fuses downstream under jit).
    return out[:, :OUT_FEATURES].astype(jnp.float32)


def init_params(key, dtype=jnp.float32):
    """Deterministic init matching nn.Linear shapes (uniform +-1/sqrt(fan_in))."""
    k1, k2, k3, k4 = jax.random.split(key, 4)
    lim1 = 1.0 / jnp.sqrt(784.0)
    lim2 = 1.0 / jnp.sqrt(128.0)
    w1 = jax.random.uniform(k1, (IN_FEATURES, HIDDEN), dtype, -lim1, lim1)
    b1 = jax.random.uniform(k2, (1, HIDDEN), dtype, -lim1, lim1)
    w2 = jax.random.uniform(k3, (HIDDEN, OUT_FEATURES), dtype, -lim2, lim2)
    b2 = jax.random.uniform(k4, (1, OUT_FEATURES), dtype, -lim2, lim2)
    return w1, b1, w2, b2


def _reference(x, w1, b1, w2, b2):
    """Plain-JAX reference mirroring the kernel's bf16 numerics."""
    B = x.shape[0]
    xb = x.reshape(B, IN_FEATURES).astype(jnp.bfloat16)
    h = jnp.maximum(
        jnp.dot(xb, w1.astype(jnp.bfloat16),
                preferred_element_type=jnp.float32) + b1, 0.0)
    y = jnp.dot(h.astype(jnp.bfloat16), w2.astype(jnp.bfloat16),
                preferred_element_type=jnp.float32) + b2
    return y.astype(jnp.bfloat16).astype(jnp.float32)


if __name__ == "__main__":
    key = jax.random.PRNGKey(0)
    kx, kp = jax.random.split(key)
    w1, b1, w2, b2 = init_params(kp)

    # Small MNIST-like batch, NCHW (B, 1, 28, 28) as in PyTorch.
    x = jax.random.normal(kx, (2, 1, 28, 28), jnp.float32)
    out = jax.block_until_ready(net_forward(x, w1, b1, w2, b2))
    ref = _reference(x, w1, b1, w2, b2)
    assert out.shape == (2, OUT_FEATURES)
    assert jnp.allclose(out, ref, atol=1e-2, rtol=1e-2)

    # Exercise the multi-tile path with a partial (non-divisible) last block.
    kx2 = jax.random.fold_in(kx, 1)
    x2 = jax.random.normal(kx2, (260, 1, 28, 28), jnp.float32)
    out2 = jax.block_until_ready(
        net_forward(x2, w1, b1, w2, b2, block_b=128))
    ref2 = _reference(x2, w1, b1, w2, b2)
    assert out2.shape == (260, OUT_FEATURES)
    assert jnp.allclose(out2, ref2, atol=1e-2, rtol=1e-2)

    print("KERNEL_OK")
</pallas_src>

<mosaic_0001>
module attributes {stable_mosaic.version = 11 : i64} {
  func.func @mlp_kernel(%arg0: i32, %arg1: memref<16x784xf32, #tpu.memory_space<vmem>>, %arg2: memref<784x128xbf16, #tpu.memory_space<vmem>>, %arg3: memref<1x128xf32, #tpu.memory_space<vmem>>, %arg4: memref<128x128xbf16, #tpu.memory_space<vmem>>, %arg5: memref<1x128xf32, #tpu.memory_space<vmem>>, %arg6: memref<16x128xbf16, #tpu.memory_space<vmem>>) attributes {dimension_semantics = [#tpu.dimension_semantics<parallel>], iteration_bounds = array<i64: 1>, scalar_prefetch = 0 : i64, scratch_operands = 0 : i64, tpu.core_type = #tpu.core_type<tc>, window_params = [{transform_indices = @transform_0, window_bounds = array<i64: 16, 784>}, {pipeline_mode = #tpu.pipeline_mode<synchronous>, transform_indices = @transform_1, window_bounds = array<i64: 784, 128>}, {pipeline_mode = #tpu.pipeline_mode<synchronous>, transform_indices = @transform_2, window_bounds = array<i64: 1, 128>}, {pipeline_mode = #tpu.pipeline_mode<synchronous>, transform_indices = @transform_3, window_bounds = array<i64: 128, 128>}, {pipeline_mode = #tpu.pipeline_mode<synchronous>, transform_indices = @transform_4, window_bounds = array<i64: 1, 128>}, {transform_indices = @transform_5, window_bounds = array<i64: 16, 128>}]} {
    %c0 = arith.constant 0 : index
    %c0_0 = arith.constant 0 : index
    %0 = vector.load %arg1[%c0, %c0_0] : memref<16x784xf32, #tpu.memory_space<vmem>>, vector<16x784xf32>
    %1 = arith.truncf %0 : vector<16x784xf32> to vector<16x784xbf16>
    %c0_1 = arith.constant 0 : index
    %c0_2 = arith.constant 0 : index
    %2 = vector.load %arg2[%c0_1, %c0_2] : memref<784x128xbf16, #tpu.memory_space<vmem>>, vector<784x128xbf16>
    %cst = arith.constant dense<0.000000e+00> : vector<16x128xf32>
    %3 = tpu.matmul %1, %2, %cst {dimension_numbers = #tpu.dot_dimension_numbers<[1], [0], [0], [1], [0, 0, 1, 1], [], []>} : vector<16x784xbf16>, vector<784x128xbf16>, vector<16x128xf32> -> vector<16x128xf32>
    %c0_3 = arith.constant 0 : index
    %c0_4 = arith.constant 0 : index
    %4 = vector.load %arg3[%c0_3, %c0_4] : memref<1x128xf32, #tpu.memory_space<vmem>>, vector<1x128xf32>
    %5 = vector.broadcast %4 : vector<1x128xf32> to vector<16x128xf32>
    %6 = arith.addf %3, %5 : vector<16x128xf32>
    %cst_5 = arith.constant 0.000000e+00 : f32
    %7 = vector.broadcast %cst_5 : f32 to vector<16x128xf32>
    %8 = arith.maximumf %6, %7 : vector<16x128xf32>
    %9 = arith.truncf %8 : vector<16x128xf32> to vector<16x128xbf16>
    %c0_6 = arith.constant 0 : index
    %c0_7 = arith.constant 0 : index
    %10 = vector.load %arg4[%c0_6, %c0_7] : memref<128x128xbf16, #tpu.memory_space<vmem>>, vector<128x128xbf16>
    %cst_8 = arith.constant dense<0.000000e+00> : vector<16x128xf32>
    %11 = tpu.matmul %9, %10, %cst_8 {dimension_numbers = #tpu.dot_dimension_numbers<[1], [0], [0], [1], [0, 0, 1, 1], [], []>} : vector<16x128xbf16>, vector<128x128xbf16>, vector<16x128xf32> -> vector<16x128xf32>
    %c0_9 = arith.constant 0 : index
    %c0_10 = arith.constant 0 : index
    %12 = vector.load %arg5[%c0_9, %c0_10] : memref<1x128xf32, #tpu.memory_space<vmem>>, vector<1x128xf32>
    %13 = vector.broadcast %12 : vector<1x128xf32> to vector<16x128xf32>
    %14 = arith.addf %11, %13 : vector<16x128xf32>
    %15 = arith.truncf %14 : vector<16x128xf32> to vector<16x128xbf16>
    %c0_11 = arith.constant 0 : index
    %c0_12 = arith.constant 0 : index
    %16 = vector.load %arg6[%c0_11, %c0_12] : memref<16x128xbf16, #tpu.memory_space<vmem>>, vector<16x128xbf16>
    tpu.vector_store %arg6[%c0_11, %c0_12], %15 {strides = array<i32>} : memref<16x128xbf16, #tpu.memory_space<vmem>>, vector<16x128xbf16>,
    return
  }
  func.func @transform_0(%arg0: i32) -> (i32, i32) {
    %c0_i32 = arith.constant 0 : i32
    %c0_i32_0 = arith.constant 0 : i32
    return %arg0, %c0_i32 : i32, i32
  }
  func.func @transform_1(%arg0: i32) -> (i32, i32) {
    %c0_i32 = arith.constant 0 : i32
    %c0_i32_0 = arith.constant 0 : i32
    %c0_i32_1 = arith.constant 0 : i32
    return %c0_i32, %c0_i32_0 : i32, i32
  }
  func.func @transform_2(%arg0: i32) -> (i32, i32) {
    %c0_i32 = arith.constant 0 : i32
    %c0_i32_0 = arith.constant 0 : i32
    %c0_i32_1 = arith.constant 0 : i32
    return %c0_i32, %c0_i32_0 : i32, i32
  }
  func.func @transform_3(%arg0: i32) -> (i32, i32) {
    %c0_i32 = arith.constant 0 : i32
    %c0_i32_0 = arith.constant 0 : i32
    %c0_i32_1 = arith.constant 0 : i32
    return %c0_i32, %c0_i32_0 : i32, i32
  }
  func.func @transform_4(%arg0: i32) -> (i32, i32) {
    %c0_i32 = arith.constant 0 : i32
    %c0_i32_0 = arith.constant 0 : i32
    %c0_i32_1 = arith.constant 0 : i32
    return %c0_i32, %c0_i32_0 : i32, i32
  }
  func.func @transform_5(%arg0: i32) -> (i32, i32) {
    %c0_i32 = arith.constant 0 : i32
    %c0_i32_0 = arith.constant 0 : i32
    return %arg0, %c0_i32 : i32, i32
  }
}

</mosaic_0001>

<llo_original>
// kernel: net_forward.1
$region0: #{net_forward.1}
  #allocation0 [shape = 'u32[]', space=smem, size = 0x4, offset = 0x4, fixed_abs, tag = 'smem constant byte address 0x4 - core index']
  #allocation1 [shape = 'u32[144,128]{1,0:T(1,128)}', space=vmem, size = 0x12000, scoped, tag = 'internal scratch']
  %s0 = inlined_call_operand.vmem [shape: f32[2,784], index: 0, kind: input, shape index: {}]
  %s1 = inlined_call_operand.vmem [shape: bf16[784,128], index: 1, kind: input, shape index: {}]
  %s2 = inlined_call_operand.vmem [shape: f32[1,128], index: 2, kind: input, shape index: {}]
  %s3 = inlined_call_operand.vmem [shape: bf16[128,128], index: 3, kind: input, shape index: {}]
  %s4 = inlined_call_operand.vmem [shape: f32[1,128], index: 4, kind: input, shape index: {}]
  %s5 = inlined_call_operand.vmem [shape: bf16[2,128], index: 5, kind: output, shape index: {}]
  %s6 = sld [smem:[#allocation0]]
  $region60: #{net_forward.1} parent=0
    _
  %s8 = ssub.s32 1, %s6
  %s9 = scalar_select 0, %s8, %s6
  $region1: #{net_forward.1} parent=0
    #allocation2 [shape = 'u8[4096]{0}', space=vmem, size = 0x1000, scoped, tag = 'output window, operand 0, single buffered']
    // Predicated region
    $region2: #{net_forward.1} parent=1 // pred_check
      _
    $region3: #{net_forward.1} parent=1 // pred_check_branch
      %11 = sbr.rel (0) target = $region5
    $region4: #{net_forward.1} parent=1 // pred_region
      _
    $region5: #{net_forward.1} parent=1 // pred_fallthru
      _
    // Predicated region
    $region6: #{net_forward.1} parent=1 // pred_check
      _
    $region7: #{net_forward.1} parent=1 // pred_check_branch
      %13 = sbr.rel (0) target = $region9
    $region8: #{net_forward.1} parent=1 // pred_region
      _
    $region9: #{net_forward.1} parent=1 // pred_fallthru
      _
    // Predicated region
    $region10: #{net_forward.1} parent=1 // pred_check
      _
    $region11: #{net_forward.1} parent=1 // pred_check_branch
      %15 = sbr.rel (0) target = $region13
    $region12: #{net_forward.1} parent=1 // pred_region
      _
    $region13: #{net_forward.1} parent=1 // pred_fallthru
      _
    // Predicated region
    $region14: #{net_forward.1} parent=1 // pred_check
      _
    $region15: #{net_forward.1} parent=1 // pred_check_branch
      %17 = sbr.rel (0) target = $region17
    $region16: #{net_forward.1} parent=1 // pred_region
      _
    $region17: #{net_forward.1} parent=1 // pred_fallthru
      _
    // Predicated region
    $region18: #{net_forward.1} parent=1 // pred_check
      _
    $region19: #{net_forward.1} parent=1 // pred_check_branch
      %19 = sbr.rel (0) target = $region21
    $region20: #{net_forward.1} parent=1 // pred_region
      _
    $region21: #{net_forward.1} parent=1 // pred_fallthru
      _
    %v21 = vld [vmem:[%s0] sm:$0xff]
    %v22 = vld [vmem:[%s0 + $0x8] sm:$0x3f]
    %v23 = vld [vmem:[%s0 + $0xe] sm:$0xff]
    %v24 = vld [vmem:[%s0 + $0x16] sm:$0x3f]
    %v25 = vld [vmem:[%s0 + $0x1c] sm:$0xff]
    %v26 = vld [vmem:[%s0 + $0x24] sm:$0x3f]
    %v27 = vld [vmem:[%s0 + $0x2a] sm:$0xff]
    %v28 = vld [vmem:[%s0 + $0x32] sm:$0x3f]
    %v29 = vld [vmem:[%s0 + $0x38] sm:$0xff]
    %v30 = vld [vmem:[%s0 + $0x40] sm:$0x3f]
    %v31 = vld [vmem:[%s0 + $0x46] sm:$0xff]
    %v32 = vld [vmem:[%s0 + $0x4e] sm:$0x3f]
    %v33 = vld [vmem:[%s0 + $0x54] sm:$0xff]
    %v34 = vld [vmem:[%s0 + $0x5c] sm:$0x3f]
    %v35 = vld [vmem:[%s0 + $0x62] sm:$0xff]
    %v36 = vld [vmem:[%s0 + $0x6a] sm:$0x3f]
    %v53 = vcombine.low %v21, %v23
    %v54 = vcombine.high %v21, %v23
    %v55 = vcombine.low %v25, %v27
    %v56 = vcombine.high %v25, %v27
    %v58 = vunpack.c.l.s4 1983009808
    %v59 = vunpack.c.0.s8 %v58
    %v60 = vlaneseq
    %v61 = vshrl.u32 %v60, 7
    %v62 = vsub.s32 %v59, %v61
    %v63 = vrot.slane %v53, %v62
    %v65 = vunpack.c.l.s4 1983009808
    %v66 = vunpack.c.0.s8 %v65
    %v67 = vlaneseq
    %v68 = vshrl.u32 %v67, 7
    %v69 = vsub.s32 %v66, %v68
    %v70 = vrot.slane %v54, %v69
    %v72 = vunpack.c.l.s4 1983009808
    %v73 = vunpack.c.0.s8 %v72
    %v74 = vlaneseq
    %v75 = vshrl.u32 %v74, 7
    %v76 = vsub.s32 %v73, %v75
    %v77 = vrot.slane %v55, %v76
    %v79 = vunpack.c.l.s4 1983009808
    %v80 = vunpack.c.0.s8 %v79
    %v81 = vlaneseq
    %v82 = vshrl.u32 %v81, 7
    %v83 = vsub.s32 %v80, %v82
    %v84 = vrot.slane %v56, %v83
    %v85 = vcombine.low %v63, %v77
    %v86 = vcombine.high %v63, %v77
    %v87 = vcombine.low %v70, %v84
    %v88 = vcombine.high %v70, %v84
    %v89 = vcombine.low %v22, %v24
    %v90 = vcombine.high %v22, %v24
    %v91 = vcombine.low %v26, %v28
    %v92 = vcombine.high %v26, %v28
    %v94 = vunpack.c.l.s4 1983009808
    %v95 = vunpack.c.0.s8 %v94
    %v96 = vlaneseq
    %v97 = vshrl.u32 %v96, 7
    %v98 = vsub.s32 %v95, %v97
    %v99 = vrot.slane %v89, %v98
    %v101 = vunpack.c.l.s4 1983009808
    %v102 = vunpack.c.0.s8 %v101
    %v103 = vlaneseq
    %v104 = vshrl.u32 %v103, 7
    %v105 = vsub.s32 %v102, %v104
    %v106 = vrot.slane %v90, %v105
    %v108 = vunpack.c.l.s4 1983009808
    %v109 = vunpack.c.0.s8 %v108
    %v110 = vlaneseq
    %v111 = vshrl.u32 %v110, 7
    %v112 = vsub.s32 %v109, %v111
    %v113 = vrot.slane %v91, %v112
    %v115 = vunpack.c.l.s4 1983009808
    %v116 = vunpack.c.0.s8 %v115
    %v117 = vlaneseq
    %v118 = vshrl.u32 %v117, 7
    %v119 = vsub.s32 %v116, %v118
    %v120 = vrot.slane %v92, %v119
    %v121 = vcombine.low %v99, %v113
    %v122 = vcombine.high %v99, %v113
    %v123 = vcombine.low %v106, %v120
    %v124 = vcombine.low %v29, %v31
    %v125 = vcombine.high %v29, %v31
    %v126 = vcombine.low %v33, %v35
    %v127 = vcombine.high %v33, %v35
    %v129 = vunpack.c.l.s4 1983009808
    %v130 = vunpack.c.0.s8 %v129
    %v131 = vlaneseq
    %v132 = vshrl.u32 %v131, 7
    %v133 = vsub.s32 %v130, %v132
    %v134 = vrot.slane %v124, %v133
    %v136 = vunpack.c.l.s4 1983009808
    %v137 = vunpack.c.0.s8 %v136
    %v138 = vlaneseq
    %v139 = vshrl.u32 %v138, 7
    %v140 = vsub.s32 %v137, %v139
    %v141 = vrot.slane %v125, %v140
    %v143 = vunpack.c.l.s4 1983009808
    %v144 = vunpack.c.0.s8 %v143
    %v145 = vlaneseq
    %v146 = vshrl.u32 %v145, 7
    %v147 = vsub.s32 %v144, %v146
    %v148 = vrot.slane %v126, %v147
    %v150 = vunpack.c.l.s4 1983009808
    %v151 = vunpack.c.0.s8 %v150
    %v152 = vlaneseq
    %v153 = vshrl.u32 %v152, 7
    %v154 = vsub.s32 %v151, %v153
    %v155 = vrot.slane %v127, %v154
    %v156 = vcombine.low %v134, %v148
    %v157 = vcombine.high %v134, %v148
    %v158 = vcombine.low %v141, %v155
    %v159 = vcombine.high %v141, %v155
    %v160 = vcombine.low %v30, %v32
    %v161 = vcombine.high %v30, %v32
    %v162 = vcombine.low %v34, %v36
    %v163 = vcombine.high %v34, %v36
    %v165 = vunpack.c.l.s4 1983009808
    %v166 = vunpack.c.0.s8 %v165
    %v167 = vlaneseq
    %v168 = vshrl.u32 %v167, 7
    %v169 = vsub.s32 %v166, %v168
    %v170 = vrot.slane %v160, %v169
    %v172 = vunpack.c.l.s4 1983009808
    %v173 = vunpack.c.0.s8 %v172
    %v174 = vlaneseq
    %v175 = vshrl.u32 %v174, 7
    %v176 = vsub.s32 %v173, %v175
    %v177 = vrot.slane %v161, %v176
    %v179 = vunpack.c.l.s4 1983009808
    %v180 = vunpack.c.0.s8 %v179
    %v181 = vlaneseq
    %v182 = vshrl.u32 %v181, 7
    %v183 = vsub.s32 %v180, %v182
    %v184 = vrot.slane %v162, %v183
    %v186 = vunpack.c.l.s4 1983009808
    %v187 = vunpack.c.0.s8 %v186
    %v188 = vlaneseq
    %v189 = vshrl.u32 %v188, 7
    %v190 = vsub.s32 %v187, %v189
    %v191 = vrot.slane %v163, %v190
    %v192 = vcombine.low %v170, %v184
    %v193 = vcombine.high %v170, %v184
    %v194 = vcombine.low %v177, %v191
    %v209 = vpack.c.bf16 %v156, %v85
    %v210 = vpack.c.bf16 %v157, %v86
    %v211 = vpack.c.bf16 %v158, %v87
    %v212 = vpack.c.bf16 %v159, %v88
    %v213 = vpack.c.bf16 %v192, %v121
    %v214 = vpack.c.bf16 %v193, %v122
    %v215 = vpack.c.bf16 %v194, %v123
    %v216 = vld [vmem:[%s1] sm:$0xf]
    %v217 = vld [vmem:[%s1 + $0x4] sm:$0xf]
    %v218 = vld [vmem:[%s1 + $0x8] sm:$0xf]
    %v219 = vld [vmem:[%s1 + $0xc] sm:$0xf]
    %v220 = vld [vmem:[%s1 + $0x10] sm:$0xf]
    %v221 = vld [vmem:[%s1 + $0x14] sm:$0xf]
    %v222 = vld [vmem:[%s1 + $0x18] sm:$0xf]
    %v223 = vld [vmem:[%s1 + $0x1c] sm:$0xf]
    %v224 = vld [vmem:[%s1 + $0x20] sm:$0xf]
    %v225 = vld [vmem:[%s1 + $0x24] sm:$0xf]
    %v226 = vld [vmem:[%s1 + $0x28] sm:$0xf]
    %v227 = vld [vmem:[%s1 + $0x2c] sm:$0xf]
    %v228 = vld [vmem:[%s1 + $0x30] sm:$0xf]
    %v229 = vld [vmem:[%s1 + $0x34] sm:$0xf]
    %v230 = vld [vmem:[%s1 + $0x38] sm:$0xf]
    %v231 = vld [vmem:[%s1 + $0x3c] sm:$0xf]
    %v232 = vld [vmem:[%s1 + $0x40] sm:$0xf]
    %v233 = vld [vmem:[%s1 + $0x44] sm:$0xf]
    %v234 = vld [vmem:[%s1 + $0x48] sm:$0xf]
    %v235 = vld [vmem:[%s1 + $0x4c] sm:$0xf]
    %v236 = vld [vmem:[%s1 + $0x50] sm:$0xf]
    %v237 = vld [vmem:[%s1 + $0x54] sm:$0xf]
    %v238 = vld [vmem:[%s1 + $0x58] sm:$0xf]
    %v239 = vld [vmem:[%s1 + $0x5c] sm:$0xf]
    %v240 = vld [vmem:[%s1 + $0x60] sm:$0xf]
    %v241 = vld [vmem:[%s1 + $0x64] sm:$0xf]
    %v242 = vld [vmem:[%s1 + $0x68] sm:$0xf]
    %v243 = vld [vmem:[%s1 + $0x6c] sm:$0xf]
    %v244 = vld [vmem:[%s1 + $0x70] sm:$0xf]
    %v245 = vld [vmem:[%s1 + $0x74] sm:$0xf]
    %v246 = vld [vmem:[%s1 + $0x78] sm:$0xf]
    %v247 = vld [vmem:[%s1 + $0x7c] sm:$0xf]
    %v248 = vld [vmem:[%s1 + $0x80] sm:$0xf]
    %v249 = vld [vmem:[%s1 + $0x84] sm:$0xf]
    %v250 = vld [vmem:[%s1 + $0x88] sm:$0xf]
    %v251 = vld [vmem:[%s1 + $0x8c] sm:$0xf]
    %v252 = vld [vmem:[%s1 + $0x90] sm:$0xf]
    %v253 = vld [vmem:[%s1 + $0x94] sm:$0xf]
    %v254 = vld [vmem:[%s1 + $0x98] sm:$0xf]
    %v255 = vld [vmem:[%s1 + $0x9c] sm:$0xf]
    %v256 = vld [vmem:[%s1 + $0xa0] sm:$0xf]
    %v257 = vld [vmem:[%s1 + $0xa4] sm:$0xf]
    %v258 = vld [vmem:[%s1 + $0xa8] sm:$0xf]
    %v259 = vld [vmem:[%s1 + $0xac] sm:$0xf]
    %v260 = vld [vmem:[%s1 + $0xb0] sm:$0xf]
    %v261 = vld [vmem:[%s1 + $0xb4] sm:$0xf]
    %v262 = vld [vmem:[%s1 + $0xb8] sm:$0xf]
    %v263 = vld [vmem:[%s1 + $0xbc] sm:$0xf]
    %v264 = vld [vmem:[%s1 + $0xc0] sm:$0xf]
    %v265 = vld [vmem:[%s1 + $0xc4] sm:$0xf]
    %v266 = vld [vmem:[%s1 + $0xc8] sm:$0xf]
    %v267 = vld [vmem:[%s1 + $0xcc] sm:$0xf]
    %v268 = vld [vmem:[%s1 + $0xd0] sm:$0xf]
    %v269 = vld [vmem:[%s1 + $0xd4] sm:$0xf]
    %v270 = vld [vmem:[%s1 + $0xd8] sm:$0xf]
    %v271 = vld [vmem:[%s1 + $0xdc] sm:$0xf]
    %v272 = vld [vmem:[%s1 + $0xe0] sm:$0xf]
    %v273 = vld [vmem:[%s1 + $0xe4] sm:$0xf]
    %v274 = vld [vmem:[%s1 + $0xe8] sm:$0xf]
    %v275 = vld [vmem:[%s1 + $0xec] sm:$0xf]
    %v276 = vld [vmem:[%s1 + $0xf0] sm:$0xf]
    %v277 = vld [vmem:[%s1 + $0xf4] sm:$0xf]
    %v278 = vld [vmem:[%s1 + $0xf8] sm:$0xf]
    %v279 = vld [vmem:[%s1 + $0xfc] sm:$0xf]
    %v280 = vld [vmem:[%s1 + $0x100] sm:$0xf]
    %v281 = vld [vmem:[%s1 + $0x104] sm:$0xf]
    %v282 = vld [vmem:[%s1 + $0x108] sm:$0xf]
    %v283 = vld [vmem:[%s1 + $0x10c] sm:$0xf]
    %v284 = vld [vmem:[%s1 + $0x110] sm:$0xf]
    %v285 = vld [vmem:[%s1 + $0x114] sm:$0xf]
    %v286 = vld [vmem:[%s1 + $0x118] sm:$0xf]
    %v287 = vld [vmem:[%s1 + $0x11c] sm:$0xf]
    %v288 = vld [vmem:[%s1 + $0x120] sm:$0xf]
    %v289 = vld [vmem:[%s1 + $0x124] sm:$0xf]
    %v290 = vld [vmem:[%s1 + $0x128] sm:$0xf]
    %v291 = vld [vmem:[%s1 + $0x12c] sm:$0xf]
    %v292 = vld [vmem:[%s1 + $0x130] sm:$0xf]
    %v293 = vld [vmem:[%s1 + $0x134] sm:$0xf]
    %v294 = vld [vmem:[%s1 + $0x138] sm:$0xf]
    %v295 = vld [vmem:[%s1 + $0x13c] sm:$0xf]
    %v296 = vld [vmem:[%s1 + $0x140] sm:$0xf]
    %v297 = vld [vmem:[%s1 + $0x144] sm:$0xf]
    %v298 = vld [vmem:[%s1 + $0x148] sm:$0xf]
    %v299 = vld [vmem:[%s1 + $0x14c] sm:$0xf]
    %v300 = vld [vmem:[%s1 + $0x150] sm:$0xf]
    %v301 = vld [vmem:[%s1 + $0x154] sm:$0xf]
    %v302 = vld [vmem:[%s1 + $0x158] sm:$0xf]
    %v303 = vld [vmem:[%s1 + $0x15c] sm:$0xf]
    %v304 = vld [vmem:[%s1 + $0x160] sm:$0xf]
    %v305 = vld [vmem:[%s1 + $0x164] sm:$0xf]
    %v306 = vld [vmem:[%s1 + $0x168] sm:$0xf]
    %v307 = vld [vmem:[%s1 + $0x16c] sm:$0xf]
    %v308 = vld [vmem:[%s1 + $0x170] sm:$0xf]
    %v309 = vld [vmem:[%s1 + $0x174] sm:$0xf]
    %v310 = vld [vmem:[%s1 + $0x178] sm:$0xf]
    %v311 = vld [vmem:[%s1 + $0x17c] sm:$0xf]
    %v312 = vld [vmem:[%s1 + $0x180] sm:$0xf]
    %v313 = vld [vmem:[%s1 + $0x184] sm:$0xf]
    %v314 = vld [vmem:[%s2] sm:$0x1]
    %v316 = vlaneseq
    %v317 = vshrl.u32 %v316, 7
    %v318 = vsub.s32 0, %v317
    %v319 = vrot.slane %v314, %v318
    %v419 = vunpack.c.l.b16 %v216
    %v420 = vunpack.c.l.b16 %v217
    %v421 = vunpack.c.l.b16 %v218
    %v422 = vunpack.c.l.b16 %v219
    %v423 = vunpack.c.l.b16 %v220
    %v424 = vunpack.c.l.b16 %v221
    %v425 = vunpack.c.l.b16 %v222
    %v426 = vunpack.c.l.b16 %v223
    %v427 = vunpack.c.l.b16 %v224
    %v428 = vunpack.c.l.b16 %v225
    %v429 = vunpack.c.l.b16 %v226
    %v430 = vunpack.c.l.b16 %v227
    %v431 = vunpack.c.l.b16 %v228
    %v432 = vunpack.c.l.b16 %v229
    %v433 = vunpack.c.l.b16 %v230
    %v434 = vunpack.c.l.b16 %v231
    %v435 = vunpack.c.l.b16 %v232
    %v436 = vunpack.c.l.b16 %v233
    %v437 = vunpack.c.l.b16 %v234
    %v438 = vunpack.c.l.b16 %v235
    %v439 = vunpack.c.l.b16 %v236
    %v440 = vunpack.c.l.b16 %v237
    %v441 = vunpack.c.l.b16 %v238
    %v442 = vunpack.c.l.b16 %v239
    %v443 = vunpack.c.l.b16 %v240
    %v444 = vunpack.c.l.b16 %v241
    %v445 = vunpack.c.l.b16 %v242
    %v446 = vunpack.c.l.b16 %v243
    %v447 = vunpack.c.l.b16 %v244
    %v448 = vunpack.c.l.b16 %v245
    %v449 = vunpack.c.l.b16 %v246
    %v450 = vunpack.c.l.b16 %v247
    %v451 = vunpack.c.l.b16 %v248
    %v452 = vunpack.c.l.b16 %v249
    %v453 = vunpack.c.l.b16 %v250
    %v454 = vunpack.c.l.b16 %v251
    %v455 = vunpack.c.l.b16 %v252
    %v456 = vunpack.c.l.b16 %v253
    %v457 = vunpack.c.l.b16 %v254
    %v458 = vunpack.c.l.b16 %v255
    %v459 = vunpack.c.l.b16 %v256
    %v460 = vunpack.c.l.b16 %v257
    %v461 = vunpack.c.l.b16 %v258
    %v462 = vunpack.c.l.b16 %v259
    %v463 = vunpack.c.l.b16 %v260
    %v464 = vunpack.c.l.b16 %v261
    %v465 = vunpack.c.l.b16 %v262
    %v466 = vunpack.c.l.b16 %v263
    %v467 = vunpack.c.l.b16 %v264
    %v468 = vunpack.c.l.b16 %v265
    %v469 = vunpack.c.l.b16 %v266
    %v470 = vunpack.c.l.b16 %v267
    %v471 = vunpack.c.l.b16 %v268
    %v472 = vunpack.c.l.b16 %v269
    %v473 = vunpack.c.l.b16 %v270
    %v474 = vunpack.c.l.b16 %v271
    %v475 = vunpack.c.l.b16 %v272
    %v476 = vunpack.c.l.b16 %v273
    %v477 = vunpack.c.l.b16 %v274
    %v478 = vunpack.c.l.b16 %v275
    %v479 = vunpack.c.l.b16 %v276
    %v480 = vunpack.c.l.b16 %v277
    %v481 = vunpack.c.l.b16 %v278
    %v482 = vunpack.c.l.b16 %v279
    %v483 = vunpack.c.l.b16 %v280
    %v484 = vunpack.c.l.b16 %v281
    %v485 = vunpack.c.l.b16 %v282
    %v486 = vunpack.c.l.b16 %v283
    %v487 = vunpack.c.l.b16 %v284
    %v488 = vunpack.c.l.b16 %v285
    %v489 = vunpack.c.l.b16 %v286
    %v490 = vunpack.c.l.b16 %v287
    %v491 = vunpack.c.l.b16 %v288
    %v492 = vunpack.c.l.b16 %v289
    %v493 = vunpack.c.l.b16 %v290
    %v494 = vunpack.c.l.b16 %v291
    %v495 = vunpack.c.l.b16 %v292
    %v496 = vunpack.c.l.b16 %v293
    %v497 = vunpack.c.l.b16 %v294
    %v498 = vunpack.c.l.b16 %v295
    %v499 = vunpack.c.l.b16 %v296
    %v500 = vunpack.c.l.b16 %v297
    %v501 = vunpack.c.l.b16 %v298
    %v502 = vunpack.c.l.b16 %v299
    %v503 = vunpack.c.l.b16 %v300
    %v504 = vunpack.c.l.b16 %v301
    %v505 = vunpack.c.l.b16 %v302
    %v506 = vunpack.c.l.b16 %v303
    %v507 = vunpack.c.l.b16 %v304
    %v508 = vunpack.c.l.b16 %v305
    %v509 = vunpack.c.l.b16 %v306
    %v510 = vunpack.c.l.b16 %v307
    %v511 = vunpack.c.l.b16 %v308
    %v512 = vunpack.c.l.b16 %v309
    %v513 = vunpack.c.l.b16 %v310
    %v514 = vunpack.c.l.b16 %v311
    %v515 = vunpack.c.l.b16 %v312
    %v516 = vunpack.c.l.b16 %v313
    %v517 = vpack.c.b16 %v420, %v419
    %v518 = vpack.c.b16 %v422, %v421
    %v519 = vpack.c.b16 %v424, %v423
    %v520 = vpack.c.b16 %v426, %v425
    %v521 = vpack.c.b16 %v428, %v427
    %v522 = vpack.c.b16 %v430, %v429
    %v523 = vpack.c.b16 %v432, %v431
    %v524 = vpack.c.b16 %v434, %v433
    %v525 = vpack.c.b16 %v436, %v435
    %v526 = vpack.c.b16 %v438, %v437
    %v527 = vpack.c.b16 %v440, %v439
    %v528 = vpack.c.b16 %v442, %v441
    %v529 = vpack.c.b16 %v444, %v443
    %v530 = vpack.c.b16 %v446, %v445
    %v531 = vpack.c.b16 %v448, %v447
    %v532 = vpack.c.b16 %v450, %v449
    %v533 = vpack.c.b16 %v452, %v451
    %v534 = vpack.c.b16 %v454, %v453
    %v535 = vpack.c.b16 %v456, %v455
    %v536 = vpack.c.b16 %v458, %v457
    %v537 = vpack.c.b16 %v460, %v459
    %v538 = vpack.c.b16 %v462, %v461
    %v539 = vpack.c.b16 %v464, %v463
    %v540 = vpack.c.b16 %v466, %v465
    %v541 = vpack.c.b16 %v468, %v467
    %v542 = vpack.c.b16 %v470, %v469
    %v543 = vpack.c.b16 %v472, %v471
    %v544 = vpack.c.b16 %v474, %v473
    %v545 = vpack.c.b16 %v476, %v475
    %v546 = vpack.c.b16 %v478, %v477
    %v547 = vpack.c.b16 %v480, %v479
    %v548 = vpack.c.b16 %v482, %v481
    %v549 = vpack.c.b16 %v484, %v483
    %v550 = vpack.c.b16 %v486, %v485
    %v551 = vpack.c.b16 %v488, %v487
    %v552 = vpack.c.b16 %v490, %v489
    %v553 = vpack.c.b16 %v492, %v491
    %v554 = vpack.c.b16 %v494, %v493
    %v555 = vpack.c.b16 %v496, %v495
    %v556 = vpack.c.b16 %v498, %v497
    %v557 = vpack.c.b16 %v500, %v499
    %v558 = vpack.c.b16 %v502, %v501
    %v559 = vpack.c.b16 %v504, %v503
    %v560 = vpack.c.b16 %v506, %v505
    %v561 = vpack.c.b16 %v508, %v507
    %v562 = vpack.c.b16 %v510, %v509
    %v563 = vpack.c.b16 %v512, %v511
    %v564 = vpack.c.b16 %v514, %v513
    %v565 = vpack.c.b16 %v516, %v515
    %vm615 = vcmask 130048
    %v617 = vsel %vm615, %v215, 0
    %619 = vmatprep.subr.bf16.mxu0 0
    %620 = vmatpush1.bf16.msra.mxu0 %v524
    %621 = vmatprep.subr.bf16.mxu0 0
    %622 = vmatpush1.bf16.msra.mxu0 %v523
    %623 = vmatprep.subr.bf16.mxu0 0
    %624 = vmatpush1.bf16.msra.mxu0 %v522
    %625 = vmatprep.subr.bf16.mxu0 0
    %626 = vmatpush1.bf16.msra.mxu0 %v521
    %627 = vmatprep.subr.bf16.mxu0 0
    %628 = vmatpush1.bf16.msra.mxu0 %v520
    %629 = vmatprep.subr.bf16.mxu0 0
    %630 = vmatpush1.bf16.msra.mxu0 %v519
    %631 = vmatprep.subr.bf16.mxu0 0
    %632 = vmatpush1.bf16.msra.mxu0 %v518
    %633 = vmatprep.subr.bf16.mxu0 0
    %634 = vmatpush1.bf16.msra.mxu0 %v517
    %635 = vmatprep.subr.bf16.mxu0 0
    %636 = vmatpush2.bf16.msra.mxu0 %v532
    %637 = vmatprep.subr.bf16.mxu0 0
    %638 = vmatpush2.bf16.msra.mxu0 %v531
    %639 = vmatprep.subr.bf16.mxu0 0
    %640 = vmatpush2.bf16.msra.mxu0 %v530
    %641 = vmatprep.subr.bf16.mxu0 0
    %642 = vmatpush2.bf16.msra.mxu0 %v529
    %643 = vmatprep.subr.bf16.mxu0 0
    %644 = vmatpush2.bf16.msra.mxu0 %v528
    %645 = vmatprep.subr.bf16.mxu0 0
    %646 = vmatpush2.bf16.msra.mxu0 %v527
    %647 = vmatprep.subr.bf16.mxu0 0
    %648 = vmatpush2.bf16.msra.mxu0 %v526
    %649 = vmatprep.subr.bf16.mxu0 0
    %650 = vmatpush2.bf16.msra.mxu0 %v525
    %651 = vmatprep.mubr.bf16.mxu0 %v210
    %652 = vmatmul.mubr.bf16.gmra.mxu0 %v209
    %v653 = vpop.f32.mrf.mxu0
    %v654 = vadd.f32 %v319, %v653
    %v655 = vpop.f32.mrf.mxu0
    %v656 = vpop.f32.mrf.mxu0
    %v657 = vadd.f32 %v319, %v656
    %v658 = vpop.f32.mrf.mxu0
    %659 = vdwg.mxu0
    %660 = vmatprep.subr.bf16.mxu0 0
    %661 = vmatpush1.bf16.msra.mxu0 %v540
    %662 = vmatprep.subr.bf16.mxu0 0
    %663 = vmatpush1.bf16.msra.mxu0 %v539
    %664 = vmatprep.subr.bf16.mxu0 0
    %665 = vmatpush1.bf16.msra.mxu0 %v538
    %666 = vmatprep.subr.bf16.mxu0 0
    %667 = vmatpush1.bf16.msra.mxu0 %v537
    %668 = vmatprep.subr.bf16.mxu0 0
    %669 = vmatpush1.bf16.msra.mxu0 %v536
    %670 = vmatprep.subr.bf16.mxu0 0
    %671 = vmatpush1.bf16.msra.mxu0 %v535
    %672 = vmatprep.subr.bf16.mxu0 0
    %673 = vmatpush1.bf16.msra.mxu0 %v534
    %674 = vmatprep.subr.bf16.mxu0 0
    %675 = vmatpush1.bf16.msra.mxu0 %v533
    %676 = vmatprep.subr.bf16.mxu0 0
    %677 = vmatpush2.bf16.msra.mxu0 %v548
    %678 = vmatprep.subr.bf16.mxu0 0
    %679 = vmatpush2.bf16.msra.mxu0 %v547
    %680 = vmatprep.subr.bf16.mxu0 0
    %681 = vmatpush2.bf16.msra.mxu0 %v546
    %682 = vmatprep.subr.bf16.mxu0 0
    %683 = vmatpush2.bf16.msra.mxu0 %v545
    %684 = vmatprep.subr.bf16.mxu0 0
    %685 = vmatpush2.bf16.msra.mxu0 %v544
    %686 = vmatprep.subr.bf16.mxu0 0
    %687 = vmatpush2.bf16.msra.mxu0 %v543
    %688 = vmatprep.subr.bf16.mxu0 0
    %689 = vmatpush2.bf16.msra.mxu0 %v542
    %690 = vmatprep.subr.bf16.mxu0 0
    %691 = vmatpush2.bf16.msra.mxu0 %v541
    %692 = vmatprep.mubr.bf16.mxu0 %v212
    %693 = vmatmul.mubr.bf16.gmra.mxu0 %v211
    %v694 = vpop.f32.mrf.mxu0
    %v695 = vadd.f32 %v654, %v694
    %v696 = vpop.f32.mrf.mxu0
    %v697 = vpop.f32.mrf.mxu0
    %v698 = vadd.f32 %v657, %v697
    %v699 = vpop.f32.mrf.mxu0
    %700 = vdwg.mxu0
    %701 = vmatprep.subr.bf16.mxu0 0
    %702 = vmatpush1.bf16.msra.mxu0 %v556
    %703 = vmatprep.subr.bf16.mxu0 0
    %704 = vmatpush1.bf16.msra.mxu0 %v555
    %705 = vmatprep.subr.bf16.mxu0 0
    %706 = vmatpush1.bf16.msra.mxu0 %v554
    %707 = vmatprep.subr.bf16.mxu0 0
    %708 = vmatpush1.bf16.msra.mxu0 %v553
    %709 = vmatprep.subr.bf16.mxu0 0
    %710 = vmatpush1.bf16.msra.mxu0 %v552
    %711 = vmatprep.subr.bf16.mxu0 0
    %712 = vmatpush1.bf16.msra.mxu0 %v551
    %713 = vmatprep.subr.bf16.mxu0 0
    %714 = vmatpush1.bf16.msra.mxu0 %v550
    %715 = vmatprep.subr.bf16.mxu0 0
    %716 = vmatpush1.bf16.msra.mxu0 %v549
    %717 = vmatprep.subr.bf16.mxu0 0
    %718 = vmatpush2.bf16.msra.mxu0 %v564
    %719 = vmatprep.subr.bf16.mxu0 0
    %720 = vmatpush2.bf16.msra.mxu0 %v563
    %721 = vmatprep.subr.bf16.mxu0 0
    %722 = vmatpush2.bf16.msra.mxu0 %v562
    %723 = vmatprep.subr.bf16.mxu0 0
    %724 = vmatpush2.bf16.msra.mxu0 %v561
    %725 = vmatprep.subr.bf16.mxu0 0
    %726 = vmatpush2.bf16.msra.mxu0 %v560
    %727 = vmatprep.subr.bf16.mxu0 0
    %728 = vmatpush2.bf16.msra.mxu0 %v559
    %729 = vmatprep.subr.bf16.mxu0 0
    %730 = vmatpush2.bf16.msra.mxu0 %v558
    %731 = vmatprep.subr.bf16.mxu0 0
    %732 = vmatpush2.bf16.msra.mxu0 %v557
    %733 = vmatprep.mubr.bf16.mxu0 %v214
    %734 = vmatmul.mubr.bf16.gmra.mxu0 %v213
    %v735 = vpop.f32.mrf.mxu0
    %v736 = vadd.f32 %v695, %v735
    %v737 = vpop.f32.mrf.mxu0
    %v738 = vpop.f32.mrf.mxu0
    %v739 = vadd.f32 %v698, %v738
    %v740 = vpop.f32.mrf.mxu0
    %741 = vdwg.mxu0
    %742 = vmatprep.subr.bf16.mxu0 0
    %743 = vmatpush1.bf16.msra.mxu0 0
    %744 = vmatprep.subr.bf16.mxu0 0
    %745 = vmatpush1.bf16.msra.mxu0 0
    %746 = vmatprep.subr.bf16.mxu0 0
    %747 = vmatpush1.bf16.msra.mxu0 0
    %748 = vmatprep.subr.bf16.mxu0 0
    %749 = vmatpush1.bf16.msra.mxu0 0
    %750 = vmatprep.subr.bf16.mxu0 0
    %751 = vmatpush1.bf16.msra.mxu0 0
    %752 = vmatprep.subr.bf16.mxu0 0
    %753 = vmatpush1.bf16.msra.mxu0 0
    %754 = vmatprep.subr.bf16.mxu0 0
    %755 = vmatpush1.bf16.msra.mxu0 0
    %756 = vmatprep.subr.bf16.mxu0 0
    %757 = vmatpush1.bf16.msra.mxu0 %v565
    %758 = vmatprep.subr.bf16.mxu0 0
    %759 = vmatpush2.bf16.msra.mxu0 0
    %760 = vmatprep.subr.bf16.mxu0 0
    %761 = vmatpush2.bf16.msra.mxu0 0
    %762 = vmatprep.subr.bf16.mxu0 0
    %763 = vmatpush2.bf16.msra.mxu0 0
    %764 = vmatprep.subr.bf16.mxu0 0
    %765 = vmatpush2.bf16.msra.mxu0 0
    %766 = vmatprep.subr.bf16.mxu0 0
    %767 = vmatpush2.bf16.msra.mxu0 0
    %768 = vmatprep.subr.bf16.mxu0 0
    %769 = vmatpush2.bf16.msra.mxu0 0
    %770 = vmatprep.subr.bf16.mxu0 0
    %771 = vmatpush2.bf16.msra.mxu0 0
    %772 = vmatprep.subr.bf16.mxu0 0
    %773 = vmatpush2.bf16.msra.mxu0 0
    %774 = vmatprep.mubr.bf16.mxu0 0
    %775 = vmatmul.mubr.bf16.gmra.mxu0 %v617
    %v776 = vpop.f32.mrf.mxu0
    %v777 = vadd.f32 %v736, %v776
    %v778 = vpop.f32.mrf.mxu0
    %v779 = vpop.f32.mrf.mxu0
    %v780 = vadd.f32 %v739, %v779
    %v781 = vpop.f32.mrf.mxu0
    %782 = vdwg.mxu0
    %v783 = vmax.f32 %v777, 0.0
    %v784 = vmax.f32 %v780, 0.0
    %v785 = vpack.c.bf16 %v784, %v783
    %v786 = vld [vmem:[%s3] sm:$0xf]
    %v787 = vld [vmem:[%s3 + $0x4] sm:$0xf]
    %v788 = vld [vmem:[%s3 + $0x8] sm:$0xf]
    %v789 = vld [vmem:[%s3 + $0xc] sm:$0xf]
    %v790 = vld [vmem:[%s3 + $0x10] sm:$0xf]
    %v791 = vld [vmem:[%s3 + $0x14] sm:$0xf]
    %v792 = vld [vmem:[%s3 + $0x18] sm:$0xf]
    %v793 = vld [vmem:[%s3 + $0x1c] sm:$0xf]
    %v794 = vld [vmem:[%s3 + $0x20] sm:$0xf]
    %v795 = vld [vmem:[%s3 + $0x24] sm:$0xf]
    %v796 = vld [vmem:[%s3 + $0x28] sm:$0xf]
    %v797 = vld [vmem:[%s3 + $0x2c] sm:$0xf]
    %v798 = vld [vmem:[%s3 + $0x30] sm:$0xf]
    %v799 = vld [vmem:[%s3 + $0x34] sm:$0xf]
    %v800 = vld [vmem:[%s3 + $0x38] sm:$0xf]
    %v801 = vld [vmem:[%s3 + $0x3c] sm:$0xf]
    %v802 = vld [vmem:[%s4] sm:$0x1]
    %v804 = vlaneseq
    %v805 = vshrl.u32 %v804, 7
    %v806 = vsub.s32 0, %v805
    %v807 = vrot.slane %v802, %v806
    %v825 = vunpack.c.l.b16 %v786
    %v826 = vunpack.c.l.b16 %v787
    %v827 = vunpack.c.l.b16 %v788
    %v828 = vunpack.c.l.b16 %v789
    %v829 = vunpack.c.l.b16 %v790
    %v830 = vunpack.c.l.b16 %v791
    %v831 = vunpack.c.l.b16 %v792
    %v832 = vunpack.c.l.b16 %v793
    %v833 = vunpack.c.l.b16 %v794
    %v834 = vunpack.c.l.b16 %v795
    %v835 = vunpack.c.l.b16 %v796
    %v836 = vunpack.c.l.b16 %v797
    %v837 = vunpack.c.l.b16 %v798
    %v838 = vunpack.c.l.b16 %v799
    %v839 = vunpack.c.l.b16 %v800
    %v840 = vunpack.c.l.b16 %v801
    %v841 = vpack.c.b16 %v826, %v825
    %v842 = vpack.c.b16 %v828, %v827
    %v843 = vpack.c.b16 %v830, %v829
    %v844 = vpack.c.b16 %v832, %v831
    %v845 = vpack.c.b16 %v834, %v833
    %v846 = vpack.c.b16 %v836, %v835
    %v847 = vpack.c.b16 %v838, %v837
    %v848 = vpack.c.b16 %v840, %v839
    %857 = vmatprep.subr.bf16.mxu0 0
    %858 = vmatpush1.bf16.msra.mxu0 %v848
    %859 = vmatprep.subr.bf16.mxu0 0
    %860 = vmatpush1.bf16.msra.mxu0 %v847
    %861 = vmatprep.subr.bf16.mxu0 0
    %862 = vmatpush1.bf16.msra.mxu0 %v846
    %863 = vmatprep.subr.bf16.mxu0 0
    %864 = vmatpush1.bf16.msra.mxu0 %v845
    %865 = vmatprep.subr.bf16.mxu0 0
    %866 = vmatpush1.bf16.msra.mxu0 %v844
    %867 = vmatprep.subr.bf16.mxu0 0
    %868 = vmatpush1.bf16.msra.mxu0 %v843
    %869 = vmatprep.subr.bf16.mxu0 0
    %870 = vmatpush1.bf16.msra.mxu0 %v842
    %871 = vmatprep.subr.bf16.mxu0 0
    %872 = vmatpush1.bf16.msra.mxu0 %v841
    %873 = vmatprep.subr.bf16.mxu0 0
    %874 = vmatpush2.bf16.msra.mxu0 0
    %875 = vmatprep.subr.bf16.mxu0 0
    %876 = vmatpush2.bf16.msra.mxu0 0
    %877 = vmatprep.subr.bf16.mxu0 0
    %878 = vmatpush2.bf16.msra.mxu0 0
    %879 = vmatprep.subr.bf16.mxu0 0
    %880 = vmatpush2.bf16.msra.mxu0 0
    %881 = vmatprep.subr.bf16.mxu0 0
    %882 = vmatpush2.bf16.msra.mxu0 0
    %883 = vmatprep.subr.bf16.mxu0 0
    %884 = vmatpush2.bf16.msra.mxu0 0
    %885 = vmatprep.subr.bf16.mxu0 0
    %886 = vmatpush2.bf16.msra.mxu0 0
    %887 = vmatprep.subr.bf16.mxu0 0
    %888 = vmatpush2.bf16.msra.mxu0 0
    %889 = vmatprep.mubr.bf16.mxu0 0
    %890 = vmatmul.mubr.bf16.gmra.mxu0 %v785
    %v891 = vpop.f32.mrf.mxu0
    %v892 = vadd.f32 %v807, %v891
    %v893 = vpop.f32.mrf.mxu0
    %v894 = vpop.f32.mrf.mxu0
    %v895 = vadd.f32 %v807, %v894
    %v896 = vpop.f32.mrf.mxu0
    %897 = vdwg.mxu0
    %v898 = vpack.c.bf16 %v895, %v892
    %v900 = vcombine.high %v898, %v898
    %v902 = vunpack.c.l.s4 1966171168
    %v903 = vunpack.c.0.s8 %v902
    %v904 = vlaneseq
    %v905 = vshrl.u32 %v904, 7
    %v906 = vsub.s32 %v903, %v905
    %v907 = vrot.slane %v898, %v906
    %v909 = vunpack.c.l.s4 1966171168
    %v910 = vunpack.c.0.s8 %v909
    %v911 = vlaneseq
    %v912 = vshrl.u32 %v911, 7
    %v913 = vsub.s32 %v910, %v912
    %v914 = vrot.slane %v900, %v913
    %v915 = vcombine.high %v907, %v907
    %v916 = vcombine.high %v914, %v914
    %v918 = vunpack.c.l.s4 1966171168
    %v919 = vunpack.c.0.s8 %v918
    %v920 = vlaneseq
    %v921 = vshrl.u32 %v920, 7
    %v922 = vsub.s32 %v919, %v921
    %v923 = vrot.slane %v907, %v922
    %v925 = vunpack.c.l.s4 1966171168
    %v926 = vunpack.c.0.s8 %v925
    %v927 = vlaneseq
    %v928 = vshrl.u32 %v927, 7
    %v929 = vsub.s32 %v926, %v928
    %v930 = vrot.slane %v914, %v929
    %v932 = vunpack.c.l.s4 1966171168
    %v933 = vunpack.c.0.s8 %v932
    %v934 = vlaneseq
    %v935 = vshrl.u32 %v934, 7
    %v936 = vsub.s32 %v933, %v935
    %v937 = vrot.slane %v915, %v936
    %v939 = vunpack.c.l.s4 1966171168
    %v940 = vunpack.c.0.s8 %v939
    %v941 = vlaneseq
    %v942 = vshrl.u32 %v941, 7
    %v943 = vsub.s32 %v940, %v942
    %v944 = vrot.slane %v916, %v943
    %v945 = vcombine.high %v923, %v923
    %v946 = vcombine.high %v930, %v930
    %v947 = vcombine.high %v937, %v937
    %v948 = vcombine.high %v944, %v944
    %957 = vst [vmem:[#allocation2] sm:$0x1] %v923
    %958 = vst [vmem:[#allocation2 + $0x1] sm:$0x1] %v937
    %959 = vst [vmem:[#allocation2 + $0x2] sm:$0x1] %v945
    %960 = vst [vmem:[#allocation2 + $0x3] sm:$0x1] %v947
    %961 = vst [vmem:[#allocation2 + $0x4] sm:$0x1] %v930
    %962 = vst [vmem:[#allocation2 + $0x5] sm:$0x1] %v944
    %963 = vst [vmem:[#allocation2 + $0x6] sm:$0x1] %v946
    %964 = vst [vmem:[#allocation2 + $0x7] sm:$0x1] %v948
    // Predicated region
    $region22: #{net_forward.1} parent=1 // pred_check
      _
    $region23: #{net_forward.1} parent=1 // pred_check_branch
      %966 = sbr.rel (0) target = $region25
    $region24: #{net_forward.1} parent=1 // pred_region
      // Predicated region
      $region26: #{net_forward.1} parent=24 // pred_check
        _
      $region27: #{net_forward.1} parent=24 // pred_check_branch
        %968 = sbr.rel (0) target = $region29
      $region28: #{net_forward.1} parent=24 // pred_region
        // Predicated region
        $region30: #{net_forward.1} parent=28 // pred_check
          _
        $region31: #{net_forward.1} parent=28 // pred_check_branch
          %970 = sbr.rel target = $region33
        $region32: #{net_forward.1} parent=28 // pred_region
          // Predicated region
          $region45: #{net_forward.1} parent=32 // pred_check
            _
          $region46: #{net_forward.1} parent=32 // pred_check_branch
            %986 = sbr.rel (0) target = $region48
          $region47: #{net_forward.1} parent=32 // pred_region
            %s988 = ssub.s32 2, 1
            loop: start=0, step=1, limit=1
            $region49: #{net_forward.1} parent=47 // loop_pre_header
              _
            $region50: #{net_forward.1} parent=47 // loop_header
              %s990 = sphi 0, %s994
              %p991 = scmp.ge.s32.totalorder %s990, 1
              %s995 = sphi [#allocation2], [#allocation2]
              %s996 = sphi %s5, %s5
            $region51: #{net_forward.1} parent=47 // loop_header_branch
              %993 = sbr.rel (%p991) target = $region55
            $region52: #{net_forward.1} parent=47 // loop_body
              %v997 = vld [vmem:[%s995] sm:%s988]
              %998 = vst [vmem:[%s996] sm:%s988] %v997
            $region53: #{net_forward.1} parent=47 // loop_footer
              %s994 = sadd.s32 1, %s990
            $region54: #{net_forward.1} parent=47 // loop_footer_branch
              %989 = sbr.rel target = $region50
            $region55: #{net_forward.1} parent=47 // loop_exit
              _
          $region48: #{net_forward.1} parent=32 // pred_fallthru
            _
        $region33: #{net_forward.1} parent=28 // pred_fallthru
          _
        // Predicated region
        $region34: #{net_forward.1} parent=28 // pred_check
          _
        $region35: #{net_forward.1} parent=28 // pred_check_branch
          %972 = sbr.rel (0) target = $region37
        $region36: #{net_forward.1} parent=28 // pred_region
          %s974 = ssub.s32 2, 1
          loop: start=0, step=1, limit=1
          $region38: #{net_forward.1} parent=36 // loop_pre_header
            _
          $region39: #{net_forward.1} parent=36 // loop_header
            %s976 = sphi 0, %s980
            %p977 = scmp.ge.s32.totalorder %s976, 1
            %s981 = sphi [#allocation2], [#allocation2]
            %s982 = sphi %s5, %s5
          $region40: #{net_forward.1} parent=36 // loop_header_branch
            %979 = sbr.rel (%p977) target = $region44
          $region41: #{net_forward.1} parent=36 // loop_body
            %v983 = vld [vmem:[%s981] sm:%s974]
            %984 = vst [vmem:[%s982] sm:%s974] %v983
          $region42: #{net_forward.1} parent=36 // loop_footer
            %s980 = sadd.s32 1, %s976
          $region43: #{net_forward.1} parent=36 // loop_footer_branch
            %975 = sbr.rel target = $region39
          $region44: #{net_forward.1} parent=36 // loop_exit
            _
        $region37: #{net_forward.1} parent=28 // pred_fallthru
          _
      $region29: #{net_forward.1} parent=24 // pred_fallthru
        _
      %999 = vnop
    $region25: #{net_forward.1} parent=1 // pred_fallthru
      _
    // Predicated region
    $region56: #{net_forward.1} parent=1 // pred_check
      _
    $region57: #{net_forward.1} parent=1 // pred_check_branch
      %1001 = sbr.rel (0) target = $region59
    $region58: #{net_forward.1} parent=1 // pred_region
      _
    $region59: #{net_forward.1} parent=1 // pred_fallthru
      _

</llo_original>
